<compile_context>
chip_gen: v5e
topology: v5e:2x2
jax: 0.10.0
libtpu: 0.0.40
codegen_flags: <defaults>
</compile_context>

<pallas_src>
import functools

import jax
import jax.numpy as jnp
from jax.experimental import pallas as pl
from jax.experimental.pallas import tpu as pltpu

DROPOUT = 0.5            # eval mode -> F.dropout is identity
IS_WEIGHTED_ADJ = False  # unweighted-adjacency branch of the reference module
IN_EDGE_FEAT = 1
ALPHA = 0.2              # LeakyReLU negative slope
NEG_BIG = -9000000000000000.0


def _round_up(x, m):
    return (x + m - 1) // m * m


def _choose_tiles(n):
    """Return (padded_n, tm, tn) with padded_n % tm == padded_n % tn == 0 and
    padded_n - n < tn (every key tile contains at least one real column)."""
    if n <= 512:
        n_pad = _round_up(n, 128)
        return n_pad, n_pad, n_pad              # single tile each way
    tm, tn = 256, 512
    return _round_up(n, 512), tm, tn


# --------------------------------------------------------------------------- #
# Kernel 1: node projection  wh = h @ W  (+ fused src/dst attention logits)
# --------------------------------------------------------------------------- #
def _project_kernel(h_ref, w_ref, wa_ref, wh_ref, logit_ref):
    h = h_ref[...]                                                    # (tm, Fin) bf16
    wh_ref[...] = jnp.dot(h, w_ref[...],
                          preferred_element_type=jnp.float32).astype(wh_ref.dtype)
    # logits[:, 0] = wh @ a_src, logits[:, 1] = wh @ a_dst  (folded: h @ (W @ a))
    logit_ref[...] = jnp.dot(h, wa_ref[...], preferred_element_type=jnp.float32)


# --------------------------------------------------------------------------- #
# Kernel 2: masked softmax + aggregation with online (flash-style) softmax
# --------------------------------------------------------------------------- #
def _attn_kernel(esrc_ref, edst_ref, adj_ref, wh_ref, out_ref,
                 m_ref, l_ref, acc_ref, *, alpha, concat, n_valid, n_padded, tn):
    ki = pl.program_id(1)

    @pl.when(ki == 0)
    def _():
        m_ref[...] = jnp.full_like(m_ref, NEG_BIG)
        l_ref[...] = jnp.zeros_like(l_ref)
        acc_ref[...] = jnp.zeros_like(acc_ref)

    # ---- attention logits for this (query-tile, key-tile) block ----
    e = esrc_ref[...] + edst_ref[...]                       # (tm,1)+(1,tn) -> (tm,tn) f32
    e = jnp.where(e > 0, e, alpha * e)                      # LeakyReLU
    adj = adj_ref[...].astype(jnp.float32)                  # int8 mask -> f32 compare
    masked = jnp.where(adj > 0.0, e, NEG_BIG)
    if n_padded != n_valid:
        # kill padded key columns exactly (so degenerate rows normalize over N, not N_pad)
        col = jax.lax.broadcasted_iota(jnp.int32, masked.shape, 1) + ki * tn
        masked = jnp.where(col < n_valid, masked, -jnp.inf)

    # ---- online softmax update ----
    m_prev = m_ref[...]
    m_new = jnp.maximum(m_prev, jnp.max(masked, axis=1, keepdims=True))
    corr = jnp.exp(m_prev - m_new)
    p = jnp.exp(masked - m_new)                             # (tm, tn) f32
    l_ref[...] = corr * l_ref[...] + jnp.sum(p, axis=1, keepdims=True)
    acc_ref[...] = corr * acc_ref[...] + jnp.dot(
        p.astype(jnp.bfloat16), wh_ref[...], preferred_element_type=jnp.float32)
    m_ref[...] = m_new
    # TODO(synk): training-mode dropout on the attention weights (eval mode => identity).

    @pl.when(ki == pl.num_programs(1) - 1)
    def _():
        hp = acc_ref[...] * pl.reciprocal(l_ref[...], approx=True)
        if concat:
            hp = jnp.where(hp > 0, hp, jnp.expm1(hp))       # ELU (expm1 for accuracy near 0)
        out_ref[...] = hp.astype(out_ref.dtype)


# --------------------------------------------------------------------------- #
# Wrapper
# --------------------------------------------------------------------------- #
def graph_attention_layer(h_nodes, edge, adj, weight, att, *, alpha=ALPHA, concat=True):
    """Pallas GAT layer (IS_WEIGHTED_ADJ=False branch; `edge` kept for interface parity)."""
    del edge  # unused: unweighted-adjacency branch of the reference module
    n, fin = h_nodes.shape
    f = weight.shape[1]
    fp = _round_up(f, 128)                      # lane-dense feature axis
    n_pad, tm, tn = _choose_tiles(n)

    # Host-side prep (cheap O(N*F) / O(N^2) byte-level work): pads, dtype casts,
    # and the tiny (Fin, 2) fold of the attention vector into the projection.
    h_p = jnp.pad(h_nodes, ((0, n_pad - n), (0, 0))).astype(jnp.bfloat16)
    w_p = jnp.pad(weight, ((0, 0), (0, fp - f))).astype(jnp.bfloat16)
    wa = (weight @ jnp.concatenate([att[:f, :], att[f:, :]], axis=1)).astype(jnp.bfloat16)
    adj_i8 = jnp.pad((adj > 0).astype(jnp.int8), ((0, n_pad - n), (0, n_pad - n)))

    # ---- kernel 1: row-tiled projection -> wh (bf16) + per-node src/dst logits ----
    wh, logits = pl.pallas_call(
        _project_kernel,
        out_shape=(jax.ShapeDtypeStruct((n_pad, fp), jnp.bfloat16),
                   jax.ShapeDtypeStruct((n_pad, 2), jnp.float32)),
        grid=(n_pad // tm,),
        in_specs=[pl.BlockSpec((tm, fin), lambda i: (i, 0)),
                  pl.BlockSpec((fin, fp), lambda i: (0, 0)),
                  pl.BlockSpec((fin, 2), lambda i: (0, 0))],
        out_specs=(pl.BlockSpec((tm, fp), lambda i: (i, 0)),
                   pl.BlockSpec((tm, 2), lambda i: (i, 0))),
        compiler_params=pltpu.CompilerParams(dimension_semantics=("parallel",)),
    )(h_p, w_p, wa)

    e_src = logits[:, 0:1]                       # (Np, 1)  query-side logits
    e_dst = logits[:, 1].reshape(1, n_pad)       # (1, Np)  key-side logits, transposed ONCE

    # ---- kernel 2: tiled masked softmax + aggregation ----
    kernel = functools.partial(_attn_kernel, alpha=alpha, concat=concat,
                               n_valid=n, n_padded=n_pad, tn=tn)
    out = pl.pallas_call(
        kernel,
        out_shape=jax.ShapeDtypeStruct((n_pad, fp), jnp.float32),
        grid=(n_pad // tm, n_pad // tn),
        in_specs=[
            pl.BlockSpec((tm, 1), lambda qi, ki: (qi, 0)),      # e_src
            pl.BlockSpec((1, tn), lambda qi, ki: (0, ki)),      # e_dst row
            pl.BlockSpec((tm, tn), lambda qi, ki: (qi, ki)),    # adj (int8)
            pl.BlockSpec((tn, fp), lambda qi, ki: (ki, 0)),     # wh key tiles (bf16)
        ],
        out_specs=pl.BlockSpec((tm, fp), lambda qi, ki: (qi, 0)),
        scratch_shapes=[pltpu.VMEM((tm, 1), jnp.float32),       # running max
                        pltpu.VMEM((tm, 1), jnp.float32),       # running denom
                        pltpu.VMEM((tm, fp), jnp.float32)],     # f32 accumulator
        compiler_params=pltpu.CompilerParams(
            dimension_semantics=("parallel", "arbitrary")),
    )(e_src, e_dst, adj_i8, wh)

    return out[:n, :f]


# --------------------------------------------------------------------------- #
# Test harness
# --------------------------------------------------------------------------- #
def _xavier_uniform(key, shape, gain=1.414):
    fan_in, fan_out = shape[0], shape[1]
    bound = gain * jnp.sqrt(6.0 / (fan_in + fan_out))
    return jax.random.uniform(key, shape, jnp.float32, -bound, bound)


def _reference(h, adj, weight, att, alpha=ALPHA, concat=True):
    """Pure-JAX f32 reference mirroring the PyTorch forward (eval mode).
    Uses the identity [wh_i || wh_j] @ att == wh_i @ a_src + wh_j @ a_dst."""
    wh = h @ weight
    f = wh.shape[1]
    e = wh @ att[:f, :] + (wh @ att[f:, :]).T
    e = jnp.where(e > 0, e, alpha * e)
    attn = jnp.where(adj > 0, e, NEG_BIG * jnp.ones_like(e))
    attn = jax.nn.softmax(attn, axis=1)
    hp = attn @ wh
    return jax.nn.elu(hp) if concat else hp


if __name__ == "__main__":
    key = jax.random.PRNGKey(0)
    # (N, Fin, F): tiny case from the module spec + a multi-tile case that
    # exercises the padded / tiled online-softmax path.
    for (N, FIN, FOUT) in [(8, 16, 32), (520, 24, 96)]:
        keys = jax.random.split(jax.random.fold_in(key, N), 5)
        weight = _xavier_uniform(keys[0], (FIN, FOUT))             # (Fin, F)
        att = _xavier_uniform(keys[1], (2 * FOUT, 1))              # (2F, 1)
        w_edge = _xavier_uniform(keys[2], (IN_EDGE_FEAT, FOUT))    # unused (IS_WEIGHTED_ADJ=False)

        h_nodes = jax.random.normal(keys[3], (N, FIN), jnp.float32)
        adj = (jax.random.uniform(keys[4], (N, N)) > 0.5).astype(jnp.float32)
        adj = jnp.maximum(adj, jnp.eye(N, dtype=jnp.float32))      # self loops -> no empty rows
        edge = jnp.ones((N, IN_EDGE_FEAT), jnp.float32)            # interface only

        out = graph_attention_layer(h_nodes, edge, adj, weight, att,
                                    alpha=ALPHA, concat=True)
        out = jax.block_until_ready(out)

        ref = _reference(h_nodes, adj, weight, att)
        assert out.shape == (N, FOUT)
        err = float(jnp.max(jnp.abs(out - ref)))
        # Tolerance loosened vs f32 reference because the MXU path runs in bf16.
        assert jnp.allclose(out, ref, atol=5e-2, rtol=5e-2), \
            f"mismatch vs reference at N={N}: max abs err {err}"
    print("KERNEL_OK")
</pallas_src>

<mosaic_0001>
module attributes {stable_mosaic.version = 11 : i64} {
  func.func @_project_kernel(%arg0: i32, %arg1: memref<128x16xbf16, #tpu.memory_space<vmem>>, %arg2: memref<16x128xbf16, #tpu.memory_space<vmem>>, %arg3: memref<16x2xbf16, #tpu.memory_space<vmem>>, %arg4: memref<128x128xbf16, #tpu.memory_space<vmem>>, %arg5: memref<128x2xf32, #tpu.memory_space<vmem>>) attributes {dimension_semantics = [#tpu.dimension_semantics<parallel>], iteration_bounds = array<i64: 1>, scalar_prefetch = 0 : i64, scratch_operands = 0 : i64, tpu.core_type = #tpu.core_type<tc>, window_params = [{transform_indices = @transform_0, window_bounds = array<i64: 128, 16>}, {pipeline_mode = #tpu.pipeline_mode<synchronous>, transform_indices = @transform_1, window_bounds = array<i64: 16, 128>}, {pipeline_mode = #tpu.pipeline_mode<synchronous>, transform_indices = @transform_2, window_bounds = array<i64: 16, 2>}, {transform_indices = @transform_3, window_bounds = array<i64: 128, 128>}, {transform_indices = @transform_4, window_bounds = array<i64: 128, 2>}]} {
    %c0 = arith.constant 0 : index
    %c0_0 = arith.constant 0 : index
    %0 = vector.load %arg1[%c0, %c0_0] : memref<128x16xbf16, #tpu.memory_space<vmem>>, vector<128x16xbf16>
    %c0_1 = arith.constant 0 : index
    %c0_2 = arith.constant 0 : index
    %1 = vector.load %arg2[%c0_1, %c0_2] : memref<16x128xbf16, #tpu.memory_space<vmem>>, vector<16x128xbf16>
    %cst = arith.constant dense<0.000000e+00> : vector<128x128xf32>
    %2 = tpu.matmul %0, %1, %cst {dimension_numbers = #tpu.dot_dimension_numbers<[1], [0], [0], [1], [0, 0, 1, 1], [], []>} : vector<128x16xbf16>, vector<16x128xbf16>, vector<128x128xf32> -> vector<128x128xf32>
    %3 = arith.truncf %2 : vector<128x128xf32> to vector<128x128xbf16>
    %c0_3 = arith.constant 0 : index
    %c0_4 = arith.constant 0 : index
    %4 = vector.load %arg4[%c0_3, %c0_4] : memref<128x128xbf16, #tpu.memory_space<vmem>>, vector<128x128xbf16>
    tpu.vector_store %arg4[%c0_3, %c0_4], %3 {strides = array<i32>} : memref<128x128xbf16, #tpu.memory_space<vmem>>, vector<128x128xbf16>,
    %c0_5 = arith.constant 0 : index
    %c0_6 = arith.constant 0 : index
    %5 = vector.load %arg3[%c0_5, %c0_6] : memref<16x2xbf16, #tpu.memory_space<vmem>>, vector<16x2xbf16>
    %cst_7 = arith.constant dense<0.000000e+00> : vector<128x2xf32>
    %6 = tpu.matmul %0, %5, %cst_7 {dimension_numbers = #tpu.dot_dimension_numbers<[1], [0], [0], [1], [0, 0, 1, 1], [], []>} : vector<128x16xbf16>, vector<16x2xbf16>, vector<128x2xf32> -> vector<128x2xf32>
    %c0_8 = arith.constant 0 : index
    %c0_9 = arith.constant 0 : index
    %7 = vector.load %arg5[%c0_8, %c0_9] : memref<128x2xf32, #tpu.memory_space<vmem>>, vector<128x2xf32>
    tpu.vector_store %arg5[%c0_8, %c0_9], %6 {strides = array<i32>} : memref<128x2xf32, #tpu.memory_space<vmem>>, vector<128x2xf32>,
    return
  }
  func.func @transform_0(%arg0: i32) -> (i32, i32) {
    %c0_i32 = arith.constant 0 : i32
    %c0_i32_0 = arith.constant 0 : i32
    return %arg0, %c0_i32 : i32, i32
  }
  func.func @transform_1(%arg0: i32) -> (i32, i32) {
    %c0_i32 = arith.constant 0 : i32
    %c0_i32_0 = arith.constant 0 : i32
    %c0_i32_1 = arith.constant 0 : i32
    return %c0_i32, %c0_i32_0 : i32, i32
  }
  func.func @transform_2(%arg0: i32) -> (i32, i32) {
    %c0_i32 = arith.constant 0 : i32
    %c0_i32_0 = arith.constant 0 : i32
    %c0_i32_1 = arith.constant 0 : i32
    return %c0_i32, %c0_i32_0 : i32, i32
  }
  func.func @transform_3(%arg0: i32) -> (i32, i32) {
    %c0_i32 = arith.constant 0 : i32
    %c0_i32_0 = arith.constant 0 : i32
    return %arg0, %c0_i32 : i32, i32
  }
  func.func @transform_4(%arg0: i32) -> (i32, i32) {
    %c0_i32 = arith.constant 0 : i32
    %c0_i32_0 = arith.constant 0 : i32
    return %arg0, %c0_i32 : i32, i32
  }
}

</mosaic_0001>

<llo_original>
// kernel: tpu_custom_call.1
$region0: #{tpu_custom_call.1}
  #allocation0 [shape = 'u32[]', space=smem, size = 0x4, offset = 0x4, fixed_abs, tag = 'smem constant byte address 0x4 - core index']
  #allocation1 [shape = 'u32[72,128]{1,0:T(1,128)}', space=vmem, size = 0x9000, scoped, tag = 'internal scratch']
  %s0 = inlined_call_operand.vmem [shape: bf16[128,16], index: 0, kind: input, shape index: {}]
  %s1 = inlined_call_operand.vmem [shape: bf16[16,128], index: 1, kind: input, shape index: {}]
  %s2 = inlined_call_operand.vmem [shape: bf16[16,2], index: 2, kind: input, shape index: {}]
  %s3 = inlined_call_operand.hbm [shape: bf16[128,128], index: 3, kind: output, shape index: {0}]
  %s4 = inlined_call_operand.vmem [shape: f32[128,2], index: 4, kind: output, shape index: {1}]
  %5 = xla_tuple %s3, %s4
  %s6 = sld [smem:[#allocation0]]
  $region30: #{tpu_custom_call.1} parent=0
    _
  %s8 = ssub.s32 1, %s6
  %s9 = scalar_select 0, %s8, %s6
  $region1: #{tpu_custom_call.1} parent=0
    #allocation2 [shape = 'u8[32768]{0}', space=vmem, size = 0x8000, scoped, tag = 'output window, operand 0, single buffered']
    #allocation3 [shape = 's32[1]{0}', space=sflag, size = 0x4, scoped, tag = 'scoped memory for tpu_custom_call.1']
    %10 = vsyncpa [#allocation3], 0
    // Predicated region
    $region2: #{tpu_custom_call.1} parent=1 // pred_check
      _
    $region3: #{tpu_custom_call.1} parent=1 // pred_check_branch
      %12 = sbr.rel (0) target = $region5
    $region4: #{tpu_custom_call.1} parent=1 // pred_region
      _
    $region5: #{tpu_custom_call.1} parent=1 // pred_fallthru
      _
    // Predicated region
    $region6: #{tpu_custom_call.1} parent=1 // pred_check
      _
    $region7: #{tpu_custom_call.1} parent=1 // pred_check_branch
      %14 = sbr.rel (0) target = $region9
    $region8: #{tpu_custom_call.1} parent=1 // pred_region
      _
    $region9: #{tpu_custom_call.1} parent=1 // pred_fallthru
      _
    // Predicated region
    $region10: #{tpu_custom_call.1} parent=1 // pred_check
      _
    $region11: #{tpu_custom_call.1} parent=1 // pred_check_branch
      %16 = sbr.rel (0) target = $region13
    $region12: #{tpu_custom_call.1} parent=1 // pred_region
      _
    $region13: #{tpu_custom_call.1} parent=1 // pred_fallthru
      _
    %v18 = vld [vmem:[%s0] sm:$0xf]
    %v19 = vld [vmem:[%s0 + $0x4] sm:$0xf]
    %v20 = vld [vmem:[%s0 + $0x8] sm:$0xf]
    %v21 = vld [vmem:[%s0 + $0xc] sm:$0xf]
    %v22 = vld [vmem:[%s0 + $0x10] sm:$0xf]
    %v23 = vld [vmem:[%s0 + $0x14] sm:$0xf]
    %v24 = vld [vmem:[%s0 + $0x18] sm:$0xf]
    %v25 = vld [vmem:[%s0 + $0x1c] sm:$0xf]
    %v26 = vld [vmem:[%s0 + $0x20] sm:$0xf]
    %v27 = vld [vmem:[%s0 + $0x24] sm:$0xf]
    %v28 = vld [vmem:[%s0 + $0x28] sm:$0xf]
    %v29 = vld [vmem:[%s0 + $0x2c] sm:$0xf]
    %v30 = vld [vmem:[%s0 + $0x30] sm:$0xf]
    %v31 = vld [vmem:[%s0 + $0x34] sm:$0xf]
    %v32 = vld [vmem:[%s0 + $0x38] sm:$0xf]
    %v33 = vld [vmem:[%s0 + $0x3c] sm:$0xf]
    %v34 = vld [vmem:[%s1] sm:$0xf]
    %v35 = vld [vmem:[%s1 + $0x4] sm:$0xf]
    %v52 = vunpack.c.l.b16 %v18
    %v53 = vunpack.c.l.b16 %v19
    %v54 = vunpack.c.l.b16 %v20
    %v55 = vunpack.c.l.b16 %v21
    %v56 = vunpack.c.l.b16 %v22
    %v57 = vunpack.c.l.b16 %v23
    %v58 = vunpack.c.l.b16 %v24
    %v59 = vunpack.c.l.b16 %v25
    %v60 = vunpack.c.l.b16 %v26
    %v61 = vunpack.c.l.b16 %v27
    %v62 = vunpack.c.l.b16 %v28
    %v63 = vunpack.c.l.b16 %v29
    %v64 = vunpack.c.l.b16 %v30
    %v65 = vunpack.c.l.b16 %v31
    %v66 = vunpack.c.l.b16 %v32
    %v67 = vunpack.c.l.b16 %v33
    %v68 = vpack.c.b16 %v53, %v52
    %v69 = vpack.c.b16 %v55, %v54
    %v70 = vpack.c.b16 %v57, %v56
    %v71 = vpack.c.b16 %v59, %v58
    %v72 = vpack.c.b16 %v61, %v60
    %v73 = vpack.c.b16 %v63, %v62
    %v74 = vpack.c.b16 %v65, %v64
    %v75 = vpack.c.b16 %v67, %v66
    %v78 = vunpack.c.l.b16 %v34
    %v79 = vunpack.c.l.b16 %v35
    %v80 = vpack.c.b16 %v79, %v78
    %vm82 = vcmask 130048
    %v84 = vsel %vm82, %v68, 0
    %v87 = vsel %vm82, %v69, 0
    %v90 = vsel %vm82, %v70, 0
    %v93 = vsel %vm82, %v71, 0
    %v96 = vsel %vm82, %v72, 0
    %v99 = vsel %vm82, %v73, 0
    %v102 = vsel %vm82, %v74, 0
    %v105 = vsel %vm82, %v75, 0
    %107 = vmatpush.bf16.msra.mxu0 0
    %108 = vmatpush.bf16.msra.mxu0 0
    %109 = vmatpush.bf16.msra.mxu0 0
    %110 = vmatpush.bf16.msra.mxu0 0
    %111 = vmatpush.bf16.msra.mxu0 0
    %112 = vmatpush.bf16.msra.mxu0 0
    %113 = vmatpush.bf16.msra.mxu0 0
    %114 = vmatpush.bf16.msra.mxu0 %v80
    %115 = vmatmul.bf16.gmra.mxu0 %v84
    %v116 = vpop.f32.mrf.mxu0
    %v117 = vadd.f32 0.0, %v116
    %v118 = vpop.f32.mrf.mxu0
    %v119 = vadd.f32 0.0, %v118
    %120 = vmatmul.bf16.gmra.mxu0 %v87
    %v121 = vpop.f32.mrf.mxu0
    %v122 = vadd.f32 0.0, %v121
    %v123 = vpop.f32.mrf.mxu0
    %v124 = vadd.f32 0.0, %v123
    %125 = vmatmul.bf16.gmra.mxu0 %v90
    %v126 = vpop.f32.mrf.mxu0
    %v127 = vadd.f32 0.0, %v126
    %v128 = vpop.f32.mrf.mxu0
    %v129 = vadd.f32 0.0, %v128
    %130 = vmatmul.bf16.gmra.mxu0 %v93
    %v131 = vpop.f32.mrf.mxu0
    %v132 = vadd.f32 0.0, %v131
    %v133 = vpop.f32.mrf.mxu0
    %v134 = vadd.f32 0.0, %v133
    %135 = vmatmul.bf16.gmra.mxu0 %v96
    %v136 = vpop.f32.mrf.mxu0
    %v137 = vadd.f32 0.0, %v136
    %v138 = vpop.f32.mrf.mxu0
    %v139 = vadd.f32 0.0, %v138
    %140 = vmatmul.bf16.gmra.mxu0 %v99
    %v141 = vpop.f32.mrf.mxu0
    %v142 = vadd.f32 0.0, %v141
    %v143 = vpop.f32.mrf.mxu0
    %v144 = vadd.f32 0.0, %v143
    %145 = vmatmul.bf16.gmra.mxu0 %v102
    %v146 = vpop.f32.mrf.mxu0
    %v147 = vadd.f32 0.0, %v146
    %v148 = vpop.f32.mrf.mxu0
    %v149 = vadd.f32 0.0, %v148
    %150 = vmatmul.bf16.gmra.mxu0 %v105
    %v151 = vpop.f32.mrf.mxu0
    %v152 = vadd.f32 0.0, %v151
    %v153 = vpop.f32.mrf.mxu0
    %v154 = vadd.f32 0.0, %v153
    %155 = vdwg.mxu0
    %v156 = vpack.c.bf16 %v117, %v117
    %v157 = vpack.c.bf16 %v119, %v119
    %v158 = vpack.c.bf16 %v122, %v122
    %v159 = vpack.c.bf16 %v124, %v124
    %v160 = vpack.c.bf16 %v127, %v127
    %v161 = vpack.c.bf16 %v129, %v129
    %v162 = vpack.c.bf16 %v132, %v132
    %v163 = vpack.c.bf16 %v134, %v134
    %v164 = vpack.c.bf16 %v137, %v137
    %v165 = vpack.c.bf16 %v139, %v139
    %v166 = vpack.c.bf16 %v142, %v142
    %v167 = vpack.c.bf16 %v144, %v144
    %v168 = vpack.c.bf16 %v147, %v147
    %v169 = vpack.c.bf16 %v149, %v149
    %v170 = vpack.c.bf16 %v152, %v152
    %v171 = vpack.c.bf16 %v154, %v154
    %172 = vst [vmem:[#allocation2] sm:$0xf] %v156
    %173 = vst [vmem:[#allocation2 + $0x4] sm:$0xf] %v157
    %174 = vst [vmem:[#allocation2 + $0x8] sm:$0xf] %v158
    %175 = vst [vmem:[#allocation2 + $0xc] sm:$0xf] %v159
    %176 = vst [vmem:[#allocation2 + $0x10] sm:$0xf] %v160
    %177 = vst [vmem:[#allocation2 + $0x14] sm:$0xf] %v161
    %178 = vst [vmem:[#allocation2 + $0x18] sm:$0xf] %v162
    %179 = vst [vmem:[#allocation2 + $0x1c] sm:$0xf] %v163
    %180 = vst [vmem:[#allocation2 + $0x20] sm:$0xf] %v164
    %181 = vst [vmem:[#allocation2 + $0x24] sm:$0xf] %v165
    %182 = vst [vmem:[#allocation2 + $0x28] sm:$0xf] %v166
    %183 = vst [vmem:[#allocation2 + $0x2c] sm:$0xf] %v167
    %184 = vst [vmem:[#allocation2 + $0x30] sm:$0xf] %v168
    %185 = vst [vmem:[#allocation2 + $0x34] sm:$0xf] %v169
    %186 = vst [vmem:[#allocation2 + $0x38] sm:$0xf] %v170
    %187 = vst [vmem:[#allocation2 + $0x3c] sm:$0xf] %v171
    %v188 = vld [vmem:[%s2] sm:$0xf]
    %v189 = vld [vmem:[%s2 + $0x4] sm:$0xf]
    %v192 = vunpack.c.l.b16 %v188
    %v193 = vunpack.c.l.b16 %v189
    %v194 = vpack.c.b16 %v193, %v192
    %196 = vmatpush.bf16.msra.mxu0 0
    %197 = vmatpush.bf16.msra.mxu0 0
    %198 = vmatpush.bf16.msra.mxu0 0
    %199 = vmatpush.bf16.msra.mxu0 0
    %200 = vmatpush.bf16.msra.mxu0 0
    %201 = vmatpush.bf16.msra.mxu0 0
    %202 = vmatpush.bf16.msra.mxu0 0
    %203 = vmatpush.bf16.msra.mxu0 %v194
    %204 = vmatmul.bf16.gmra.mxu0 %v84
    %v205 = vpop.f32.mrf.mxu0
    %v206 = vadd.f32 0.0, %v205
    %v207 = vpop.f32.mrf.mxu0
    %v208 = vadd.f32 0.0, %v207
    %209 = vmatmul.bf16.gmra.mxu0 %v87
    %v210 = vpop.f32.mrf.mxu0
    %v211 = vadd.f32 0.0, %v210
    %v212 = vpop.f32.mrf.mxu0
    %v213 = vadd.f32 0.0, %v212
    %214 = vmatmul.bf16.gmra.mxu0 %v90
    %v215 = vpop.f32.mrf.mxu0
    %v216 = vadd.f32 0.0, %v215
    %v217 = vpop.f32.mrf.mxu0
    %v218 = vadd.f32 0.0, %v217
    %219 = vmatmul.bf16.gmra.mxu0 %v93
    %v220 = vpop.f32.mrf.mxu0
    %v221 = vadd.f32 0.0, %v220
    %v222 = vpop.f32.mrf.mxu0
    %v223 = vadd.f32 0.0, %v222
    %224 = vmatmul.bf16.gmra.mxu0 %v96
    %v225 = vpop.f32.mrf.mxu0
    %v226 = vadd.f32 0.0, %v225
    %v227 = vpop.f32.mrf.mxu0
    %v228 = vadd.f32 0.0, %v227
    %229 = vmatmul.bf16.gmra.mxu0 %v99
    %v230 = vpop.f32.mrf.mxu0
    %v231 = vadd.f32 0.0, %v230
    %v232 = vpop.f32.mrf.mxu0
    %v233 = vadd.f32 0.0, %v232
    %234 = vmatmul.bf16.gmra.mxu0 %v102
    %v235 = vpop.f32.mrf.mxu0
    %v236 = vadd.f32 0.0, %v235
    %v237 = vpop.f32.mrf.mxu0
    %v238 = vadd.f32 0.0, %v237
    %239 = vmatmul.bf16.gmra.mxu0 %v105
    %v240 = vpop.f32.mrf.mxu0
    %v241 = vadd.f32 0.0, %v240
    %v242 = vpop.f32.mrf.mxu0
    %v243 = vadd.f32 0.0, %v242
    %244 = vdwg.mxu0
    %vm245 = vcmask 15360
    %246 = vst.msk [vmem:[%s4] sm:$0xff] %vm245, %v206
    %247 = vst.msk [vmem:[%s4 + $0x8] sm:$0xff] %vm245, %v208
    %248 = vst.msk [vmem:[%s4 + $0x10] sm:$0xff] %vm245, %v211
    %249 = vst.msk [vmem:[%s4 + $0x18] sm:$0xff] %vm245, %v213
    %250 = vst.msk [vmem:[%s4 + $0x20] sm:$0xff] %vm245, %v216
    %251 = vst.msk [vmem:[%s4 + $0x28] sm:$0xff] %vm245, %v218
    %252 = vst.msk [vmem:[%s4 + $0x30] sm:$0xff] %vm245, %v221
    %253 = vst.msk [vmem:[%s4 + $0x38] sm:$0xff] %vm245, %v223
    %254 = vst.msk [vmem:[%s4 + $0x40] sm:$0xff] %vm245, %v226
    %255 = vst.msk [vmem:[%s4 + $0x48] sm:$0xff] %vm245, %v228
    %256 = vst.msk [vmem:[%s4 + $0x50] sm:$0xff] %vm245, %v231
    %257 = vst.msk [vmem:[%s4 + $0x58] sm:$0xff] %vm245, %v233
    %258 = vst.msk [vmem:[%s4 + $0x60] sm:$0xff] %vm245, %v236
    %259 = vst.msk [vmem:[%s4 + $0x68] sm:$0xff] %vm245, %v238
    %260 = vst.msk [vmem:[%s4 + $0x70] sm:$0xff] %vm245, %v241
    %261 = vst.msk [vmem:[%s4 + $0x78] sm:$0xff] %vm245, %v243
    // Predicated region
    $region14: #{tpu_custom_call.1} parent=1 // pred_check
      _
    $region15: #{tpu_custom_call.1} parent=1 // pred_check_branch
      %263 = sbr.rel (0) target = $region17
    $region16: #{tpu_custom_call.1} parent=1 // pred_region
      %265 = vsyncadd [#allocation3], 0
      %s266 = sshll.u32 [#allocation2], 4
      %s267 = int_to_ptr.vmem [resolvable:$true] %s266
      %s268 = sshll.u32 %s3, 4
      %s269 = int_to_ptr.hbm [resolvable:$true] %s268
      %274 = dma.vmem_to_hbm [thread:$0]  %s267, 1024, %s269, [#allocation3], 64, 64, 4
    $region17: #{tpu_custom_call.1} parent=1 // pred_fallthru
      _
    // Predicated region
    $region18: #{tpu_custom_call.1} parent=1 // pred_check
      _
    $region19: #{tpu_custom_call.1} parent=1 // pred_check_branch
      %276 = sbr.rel (0) target = $region21
    $region20: #{tpu_custom_call.1} parent=1 // pred_region
      _
    $region21: #{tpu_custom_call.1} parent=1 // pred_fallthru
      _
    // Predicated region
    $region22: #{tpu_custom_call.1} parent=1 // pred_check
      _
    $region23: #{tpu_custom_call.1} parent=1 // pred_check_branch
      %278 = sbr.rel (0) target = $region25
    $region24: #{tpu_custom_call.1} parent=1 // pred_region
      %280 = dma.done [#allocation3], 1024
    $region25: #{tpu_custom_call.1} parent=1 // pred_fallthru
      _
    // Predicated region
    $region26: #{tpu_custom_call.1} parent=1 // pred_check
      _
    $region27: #{tpu_custom_call.1} parent=1 // pred_check_branch
      %282 = sbr.rel (0) target = $region29
    $region28: #{tpu_custom_call.1} parent=1 // pred_region
      _
    $region29: #{tpu_custom_call.1} parent=1 // pred_fallthru
      _
    %283 = vsyncpa [#allocation3], 1

</llo_original>
